<compile_context>
chip_gen: v7x
topology: tpu7x:2x2x1
jax: 0.10.0
libtpu: 0.0.40
codegen_flags: <defaults>
</compile_context>

<pallas_src>
import jax
import jax.numpy as jnp
from jax.experimental import pallas as pl
from jax.experimental.pallas import tpu as pltpu

C_IN_EACH = 64    # channels of each of x1, x2 (concat -> 128)
C_OUT = 64        # conv output channels


def _fusion_kernel(x1_ref, x2_ref, w1_ref, w2_ref, b_ref, o_ref):
    # (64, tn) = (64, 64) @ (64, tn): MXU matmuls with f32 accumulation,
    # bias add on the VPU.  Pixel axis (tn) is the lane axis.
    acc = jnp.dot(w1_ref[...], x1_ref[0], preferred_element_type=jnp.float32)
    acc = acc + jnp.dot(w2_ref[...], x2_ref[0], preferred_element_type=jnp.float32)
    o_ref[0] = (acc + b_ref[...]).astype(o_ref.dtype)


def _choose_hw_tile(hw, max_tile):
    """Pick a pixel-axis tile and block count.

    - HW small: one full-extent block (always legal).
    - Else: largest multiple of 128 (<= max_tile) that divides HW exactly.
    - Else: cap at a 128-multiple and let Pallas mask the ragged last block
      (a 1x1 conv is column-wise independent, so padded columns are harmless
      and their writeback is dropped).
    """
    if hw <= max_tile:
        return hw, 1
    cap = max_tile - (max_tile % 128)
    t = cap
    while t >= 128:
        if hw % t == 0:
            return t, hw // t
        t -= 128
    return cap, pl.cdiv(hw, cap)


def fusion_forward(x1_nchw, x2_nchw, weight, bias, *, max_hw_tile=4096):
    """x1_nchw, x2_nchw: (N, 64, H, W); weight: (64, 128, 1, 1); bias: (64,)."""
    N, C1, H, W = x1_nchw.shape
    assert C1 == C_IN_EACH and x2_nchw.shape == x1_nchw.shape
    HW = H * W

    # Free views: NCHW -> (N, C, H*W).  No transposes, no extra HBM traffic.
    x1 = x1_nchw.reshape(N, C_IN_EACH, HW)
    x2 = x2_nchw.reshape(N, C_IN_EACH, HW)

    # Split the 1x1-conv weight for the fused concat.  Kept in (out, in)
    # orientation so the kernel computes W @ x directly (no transpose).
    w2d = weight.reshape(C_OUT, 2 * C_IN_EACH)
    w1 = w2d[:, :C_IN_EACH]            # (64, 64)
    w2 = w2d[:, C_IN_EACH:]            # (64, 64)
    b = bias.reshape(C_OUT, 1)         # broadcast over the pixel (lane) axis

    tn, n_hw_blocks = _choose_hw_tile(HW, max_hw_tile)
    grid = (N, n_hw_blocks)

    itemsize = jnp.dtype(x1.dtype).itemsize
    cost = pl.CostEstimate(
        flops=2 * N * HW * (2 * C_IN_EACH) * C_OUT,
        transcendentals=0,
        bytes_accessed=(3 * N * HW * C_IN_EACH + 2 * C_IN_EACH * C_OUT + C_OUT)
        * itemsize,
    )

    # NOTE: if the surrounding model tolerates it, casting x1/x2/w1/w2 to
    # bf16 here (keeping f32 accumulation in the kernel) halves HBM bytes
    # for this bandwidth-bound kernel.  Kept f32 to match the reference.
    out = pl.pallas_call(
        _fusion_kernel,
        out_shape=jax.ShapeDtypeStruct((N, C_OUT, HW), x1.dtype),
        grid_spec=pltpu.PrefetchScalarGridSpec(
            num_scalar_prefetch=0,
            grid=grid,
            in_specs=[
                pl.BlockSpec((1, C_IN_EACH, tn), lambda n, j: (n, 0, j)),   # x1
                pl.BlockSpec((1, C_IN_EACH, tn), lambda n, j: (n, 0, j)),   # x2
                pl.BlockSpec((C_OUT, C_IN_EACH), lambda n, j: (0, 0)),      # W1
                pl.BlockSpec((C_OUT, C_IN_EACH), lambda n, j: (0, 0)),      # W2
                pl.BlockSpec((C_OUT, 1), lambda n, j: (0, 0)),              # bias
            ],
            out_specs=pl.BlockSpec((1, C_OUT, tn), lambda n, j: (n, 0, j)),
        ),
        compiler_params=pltpu.CompilerParams(
            # Both axes independent -> shard across the 2 TCs on v7x.
            dimension_semantics=("parallel", "parallel")),
        cost_estimate=cost,
    )(x1, x2, w1, w2, b)

    # Free view back to NCHW.
    return out.reshape(N, C_OUT, H, W)


if __name__ == "__main__":
    key = jax.random.PRNGKey(0)
    k_x1, k_x2, k_w, k_b = jax.random.split(key, 4)

    # Small shapes consistent with the module: H*W = 256 (lane-dense tile).
    N, H, W = 2, 16, 16
    x1 = jax.random.normal(k_x1, (N, C_IN_EACH, H, W), dtype=jnp.float32)
    x2 = jax.random.normal(k_x2, (N, C_IN_EACH, H, W), dtype=jnp.float32)

    # Conv2d(128, 64, 1): weight (64, 128, 1, 1), bias (64,)
    weight = jax.random.normal(k_w, (C_OUT, 2 * C_IN_EACH, 1, 1), dtype=jnp.float32) * 0.05
    bias = jax.random.normal(k_b, (C_OUT,), dtype=jnp.float32) * 0.05

    out = fusion_forward(x1, x2, weight, bias)
    out = jax.block_until_ready(out)

    # Pure-JAX reference of the PyTorch forward (concat + 1x1 conv).
    f = jnp.concatenate([x1, x2], axis=1)                           # (N, 128, H, W)
    ref = jnp.einsum("nchw,oc->nohw", f, weight.reshape(C_OUT, -1)) \
        + bias.reshape(1, C_OUT, 1, 1)
    assert out.shape == (N, C_OUT, H, W)
    assert jnp.allclose(out, ref, atol=1e-4, rtol=1e-4)

    print("KERNEL_OK")
</pallas_src>

<mosaic_0001>
module attributes {stable_mosaic.version = 11 : i64} {
  func.func @_fusion_kernel(%arg0: i32, %arg1: i32, %arg2: memref<1x64x256xf32, #tpu.memory_space<vmem>>, %arg3: memref<1x64x256xf32, #tpu.memory_space<vmem>>, %arg4: memref<64x64xf32, #tpu.memory_space<vmem>>, %arg5: memref<64x64xf32, #tpu.memory_space<vmem>>, %arg6: memref<64x1xf32, #tpu.memory_space<vmem>>, %arg7: memref<1x64x256xf32, #tpu.memory_space<vmem>>) attributes {dimension_semantics = [#tpu.dimension_semantics<parallel>, #tpu.dimension_semantics<parallel>], iteration_bounds = array<i64: 2, 1>, scalar_prefetch = 0 : i64, scratch_operands = 0 : i64, tpu.core_type = #tpu.core_type<tc>, window_params = [{transform_indices = @transform_0, window_bounds = array<i64: 1, 64, 256>}, {transform_indices = @transform_1, window_bounds = array<i64: 1, 64, 256>}, {pipeline_mode = #tpu.pipeline_mode<synchronous>, transform_indices = @transform_2, window_bounds = array<i64: 64, 64>}, {pipeline_mode = #tpu.pipeline_mode<synchronous>, transform_indices = @transform_3, window_bounds = array<i64: 64, 64>}, {pipeline_mode = #tpu.pipeline_mode<synchronous>, transform_indices = @transform_4, window_bounds = array<i64: 64, 1>}, {transform_indices = @transform_5, window_bounds = array<i64: 1, 64, 256>}]} {
    %c0 = arith.constant 0 : index
    %c0_0 = arith.constant 0 : index
    %0 = vector.load %arg4[%c0, %c0_0] : memref<64x64xf32, #tpu.memory_space<vmem>>, vector<64x64xf32>
    %c0_1 = arith.constant 0 : index
    %c0_2 = arith.constant 0 : index
    %c0_3 = arith.constant 0 : index
    %1 = vector.load %arg2[%c0_1, %c0_2, %c0_3] : memref<1x64x256xf32, #tpu.memory_space<vmem>>, vector<1x64x256xf32>
    %2 = vector.shape_cast %1 : vector<1x64x256xf32> to vector<64x256xf32>
    %cst = arith.constant dense<0.000000e+00> : vector<64x256xf32>
    %3 = tpu.matmul %0, %2, %cst {dimension_numbers = #tpu.dot_dimension_numbers<[1], [0], [0], [1], [0, 0, 1, 1], [], []>} : vector<64x64xf32>, vector<64x256xf32>, vector<64x256xf32> -> vector<64x256xf32>
    %c0_4 = arith.constant 0 : index
    %c0_5 = arith.constant 0 : index
    %4 = vector.load %arg5[%c0_4, %c0_5] : memref<64x64xf32, #tpu.memory_space<vmem>>, vector<64x64xf32>
    %c0_6 = arith.constant 0 : index
    %c0_7 = arith.constant 0 : index
    %c0_8 = arith.constant 0 : index
    %5 = vector.load %arg3[%c0_6, %c0_7, %c0_8] : memref<1x64x256xf32, #tpu.memory_space<vmem>>, vector<1x64x256xf32>
    %6 = vector.shape_cast %5 : vector<1x64x256xf32> to vector<64x256xf32>
    %cst_9 = arith.constant dense<0.000000e+00> : vector<64x256xf32>
    %7 = tpu.matmul %4, %6, %cst_9 {dimension_numbers = #tpu.dot_dimension_numbers<[1], [0], [0], [1], [0, 0, 1, 1], [], []>} : vector<64x64xf32>, vector<64x256xf32>, vector<64x256xf32> -> vector<64x256xf32>
    %8 = arith.addf %3, %7 : vector<64x256xf32>
    %c0_10 = arith.constant 0 : index
    %c0_11 = arith.constant 0 : index
    %9 = vector.load %arg6[%c0_10, %c0_11] : memref<64x1xf32, #tpu.memory_space<vmem>>, vector<64x1xf32>
    %10 = vector.broadcast %9 : vector<64x1xf32> to vector<64x256xf32>
    %11 = arith.addf %8, %10 : vector<64x256xf32>
    %c0_12 = arith.constant 0 : index
    %c0_13 = arith.constant 0 : index
    %c0_14 = arith.constant 0 : index
    %12 = vector.load %arg7[%c0_12, %c0_13, %c0_14] : memref<1x64x256xf32, #tpu.memory_space<vmem>>, vector<1x64x256xf32>
    %13 = vector.shape_cast %12 : vector<1x64x256xf32> to vector<64x256xf32>
    %14 = vector.shape_cast %11 : vector<64x256xf32> to vector<1x64x256xf32>
    tpu.vector_store %arg7[%c0_12, %c0_13, %c0_14], %14 {strides = array<i32>} : memref<1x64x256xf32, #tpu.memory_space<vmem>>, vector<1x64x256xf32>,
    return
  }
  func.func @transform_0(%arg0: i32, %arg1: i32) -> (i32, i32, i32) {
    %c0_i32 = arith.constant 0 : i32
    %c0_i32_0 = arith.constant 0 : i32
    return %arg0, %c0_i32, %arg1 : i32, i32, i32
  }
  func.func @transform_1(%arg0: i32, %arg1: i32) -> (i32, i32, i32) {
    %c0_i32 = arith.constant 0 : i32
    %c0_i32_0 = arith.constant 0 : i32
    return %arg0, %c0_i32, %arg1 : i32, i32, i32
  }
  func.func @transform_2(%arg0: i32, %arg1: i32) -> (i32, i32) {
    %c0_i32 = arith.constant 0 : i32
    %c0_i32_0 = arith.constant 0 : i32
    %c0_i32_1 = arith.constant 0 : i32
    return %c0_i32, %c0_i32_0 : i32, i32
  }
  func.func @transform_3(%arg0: i32, %arg1: i32) -> (i32, i32) {
    %c0_i32 = arith.constant 0 : i32
    %c0_i32_0 = arith.constant 0 : i32
    %c0_i32_1 = arith.constant 0 : i32
    return %c0_i32, %c0_i32_0 : i32, i32
  }
  func.func @transform_4(%arg0: i32, %arg1: i32) -> (i32, i32) {
    %c0_i32 = arith.constant 0 : i32
    %c0_i32_0 = arith.constant 0 : i32
    %c0_i32_1 = arith.constant 0 : i32
    return %c0_i32, %c0_i32_0 : i32, i32
  }
  func.func @transform_5(%arg0: i32, %arg1: i32) -> (i32, i32, i32) {
    %c0_i32 = arith.constant 0 : i32
    %c0_i32_0 = arith.constant 0 : i32
    return %arg0, %c0_i32, %arg1 : i32, i32, i32
  }
}

</mosaic_0001>

<llo_original>
// kernel: tpu_custom_call.1
$region0: #{tpu_custom_call.1}
  #allocation0 [shape = 'u32[]', space=smem, size = 0x4, offset = 0x4, fixed_abs, tag = 'smem constant byte address 0x4 - core index']
  #allocation1 [shape = 'u32[144,128]{1,0:T(1,128)}', space=vmem, size = 0x12000, scoped, tag = 'internal scratch']
  %s0 = inlined_call_operand.hbm [shape: f32[2,64,256], index: 0, kind: input, shape index: {}]
  %s1 = inlined_call_operand.hbm [shape: f32[2,64,256], index: 1, kind: input, shape index: {}]
  %s2 = inlined_call_operand.vmem [shape: f32[64,64], index: 2, kind: input, shape index: {}]
  %s3 = inlined_call_operand.hbm [shape: f32[64,64], index: 3, kind: input, shape index: {}]
  %s4 = inlined_call_operand.vmem [shape: f32[64,1], index: 4, kind: input, shape index: {}]
  %s5 = inlined_call_operand.hbm [shape: f32[2,64,256], index: 5, kind: output, shape index: {}]
  %s6 = sld [smem:[#allocation0]]
  $region65: #{tpu_custom_call.1} parent=0
    _
  %s8 = ssub.s32 1, %s6
  %s9 = scalar_select 0, %s8, %s6
  $region1: #{tpu_custom_call.1} parent=0
    #allocation2 [shape = 'u8[131072]{0}', space=vmem, size = 0x20000, scoped, tag = 'input window, operand 0']
    #allocation3 [shape = 's32[2]{0}', space=sflag, size = 0x8, scoped, tag = 'scoped memory for tpu_custom_call.1']
    #allocation4 [shape = 's32[2]{0}', space=sflag, size = 0x8, scoped, tag = 'scoped memory for tpu_custom_call.1']
    #allocation5 [shape = 'u8[131072]{0}', space=vmem, size = 0x20000, scoped, tag = 'input window, operand 1']
    #allocation6 [shape = 's32[2]{0}', space=sflag, size = 0x8, scoped, tag = 'scoped memory for tpu_custom_call.1']
    #allocation7 [shape = 'u8[32768]{0}', space=vmem, size = 0x8000, scoped, tag = 'input window, operand 3, single buffered']
    #allocation8 [shape = 'u8[131072]{0}', space=vmem, size = 0x20000, scoped, tag = 'output window, operand 0']
    %10 = vsyncpa [#allocation3], 0
    %s11 = scalar_lea.sflag [#allocation3], 1
    %12 = vsyncpa %s11, 0
    %13 = vsyncpa [#allocation6], 0
    %s14 = scalar_lea.sflag [#allocation6], 1
    %15 = vsyncpa %s14, 0
    %16 = vsyncpa [#allocation4], 0
    %s17 = scalar_lea.sflag [#allocation4], 1
    %18 = vsyncpa %s17, 0
    loop: start=0, step=1, limit=4
    $region2: #{tpu_custom_call.1} parent=1 // loop_pre_header
      _
    $region3: #{tpu_custom_call.1} parent=1 // loop_header
      %s20 = sphi 0, %s24
      %p21 = scmp.ge.s32.totalorder %s20, 4
      %s27 = sphi 0, %s39
      %s28 = sphi 0, %s35
      %s29 = sphi 0, %s27
      %s30 = sphi 0, %s28
      %s31 = sphi 0, %s29
      %s32 = sphi 0, %s30
      %s44 = sphi 0, %s46
      %s47 = sphi 0, %s44
      %s48 = sphi 0, %s47
      %s64 = sphi 0, %s48
      %s72 = sphi 0, %s74
      %s75 = sphi 0, %s72
      %s76 = sphi 0, %s75
      %s92 = sphi 0, %s76
      %s96 = sphi 0, %s96
      %s98 = sphi 0, %s96
      %s99 = sphi 0, %s98
      %s113 = sphi 0, %s99
      %s117 = sphi 0, %s117
      %s119 = sphi 0, %s117
      %s120 = sphi 0, %s119
      %s134 = sphi 0, %s120
      %s138 = sphi 0, %s138
      %s140 = sphi 0, %s138
      %s141 = sphi 0, %s140
      %s155 = sphi 0, %s141
      %s163 = sphi 0, %s165
      %s166 = sphi 0, %s163
      %s167 = sphi 0, %s166
      %s183 = sphi 0, %s167
    $region4: #{tpu_custom_call.1} parent=1 // loop_header_branch
      %23 = sbr.rel (%p21) target = $region8
    $region5: #{tpu_custom_call.1} parent=1 // loop_body
      %s25 = ssub.s32 %s20, 1
      %s26 = ssub.s32 %s20, 2
      %s33 = sadd.s32 1, %s28
      %p34 = scmp.ge.s32.totalorder %s33, 1
      %s35 = scalar_select %p34, 0, %s33
      %s36 = sadd.s32 1, %s27
      %s37 = scalar_select %p34, %s36, %s27
      %p38 = scmp.ge.s32.totalorder %s37, 2
      %s39 = scalar_select %p38, 0, %s37
      %s40 = ssub.s32 %s27, %s39
      %s41 = ssub.s32 %s28, %s35
      %s42 = sor.u32 %s40, %s41
      %p43 = scmp.eq.s32.totalorder %s42, 0
      %s45 = sadd.s32 %s44, 1
      %s46 = scalar_select %p43, %s44, %s45
      %p49 = pneg %p43
      %p50 = scmp.eq.s32.totalorder %s20, 1
      %p51 = por %p49, %p50
      %p52 = scmp.ne.s32.totalorder %s44, %s47
      %p53 = scmp.eq.s32.totalorder %s20, 0
      %p54 = por %p52, %p53
      %p55 = scmp.ne.s32.totalorder %s44, %s47
      %p56 = scmp.eq.s32.totalorder %s25, 1
      %p57 = por %p55, %p56
      %p58 = scmp.ne.s32.totalorder %s47, %s48
      %p59 = scmp.eq.s32.totalorder %s25, 0
      %p60 = por %p58, %p59
      %p61 = scmp.ne.s32.totalorder %s47, %s48
      %p62 = scmp.eq.s32.totalorder %s26, 1
      %p63 = por %p61, %p62
      %p65 = scmp.ne.s32.totalorder %s48, %s64
      %p66 = scmp.eq.s32.totalorder %s26, 0
      %p67 = por %p65, %p66
      %s68 = ssub.s32 %s27, %s39
      %s69 = ssub.s32 %s28, %s35
      %s70 = sor.u32 %s68, %s69
      %p71 = scmp.eq.s32.totalorder %s70, 0
      %s73 = sadd.s32 %s72, 1
      %s74 = scalar_select %p71, %s72, %s73
      %p77 = pneg %p71
      %p78 = scmp.eq.s32.totalorder %s20, 1
      %p79 = por %p77, %p78
      %p80 = scmp.ne.s32.totalorder %s72, %s75
      %p81 = scmp.eq.s32.totalorder %s20, 0
      %p82 = por %p80, %p81
      %p83 = scmp.ne.s32.totalorder %s72, %s75
      %p84 = scmp.eq.s32.totalorder %s25, 1
      %p85 = por %p83, %p84
      %p86 = scmp.ne.s32.totalorder %s75, %s76
      %p87 = scmp.eq.s32.totalorder %s25, 0
      %p88 = por %p86, %p87
      %p89 = scmp.ne.s32.totalorder %s75, %s76
      %p90 = scmp.eq.s32.totalorder %s26, 1
      %p91 = por %p89, %p90
      %p93 = scmp.ne.s32.totalorder %s76, %s92
      %p94 = scmp.eq.s32.totalorder %s26, 0
      %p95 = por %p93, %p94
      %s97 = sadd.s32 %s96, 1
      %p100 = scmp.eq.s32.totalorder %s20, 1
      %p101 = scmp.ne.s32.totalorder %s96, %s98
      %p102 = scmp.eq.s32.totalorder %s20, 0
      %p103 = por %p101, %p102
      %p104 = scmp.ne.s32.totalorder %s96, %s98
      %p105 = scmp.eq.s32.totalorder %s25, 1
      %p106 = por %p104, %p105
      %p107 = scmp.ne.s32.totalorder %s98, %s99
      %p108 = scmp.eq.s32.totalorder %s25, 0
      %p109 = por %p107, %p108
      %p110 = scmp.ne.s32.totalorder %s98, %s99
      %p111 = scmp.eq.s32.totalorder %s26, 1
      %p112 = por %p110, %p111
      %p114 = scmp.ne.s32.totalorder %s99, %s113
      %p115 = scmp.eq.s32.totalorder %s26, 0
      %p116 = por %p114, %p115
      %s118 = sadd.s32 %s117, 1
      %p121 = scmp.eq.s32.totalorder %s20, 1
      %p122 = scmp.ne.s32.totalorder %s117, %s119
      %p123 = scmp.eq.s32.totalorder %s20, 0
      %p124 = por %p122, %p123
      %p125 = scmp.ne.s32.totalorder %s117, %s119
      %p126 = scmp.eq.s32.totalorder %s25, 1
      %p127 = por %p125, %p126
      %p128 = scmp.ne.s32.totalorder %s119, %s120
      %p129 = scmp.eq.s32.totalorder %s25, 0
      %p130 = por %p128, %p129
      %p131 = scmp.ne.s32.totalorder %s119, %s120
      %p132 = scmp.eq.s32.totalorder %s26, 1
      %p133 = por %p131, %p132
      %p135 = scmp.ne.s32.totalorder %s120, %s134
      %p136 = scmp.eq.s32.totalorder %s26, 0
      %p137 = por %p135, %p136
      %s139 = sadd.s32 %s138, 1
      %p142 = scmp.eq.s32.totalorder %s20, 1
      %p143 = scmp.ne.s32.totalorder %s138, %s140
      %p144 = scmp.eq.s32.totalorder %s20, 0
      %p145 = por %p143, %p144
      %p146 = scmp.ne.s32.totalorder %s138, %s140
      %p147 = scmp.eq.s32.totalorder %s25, 1
      %p148 = por %p146, %p147
      %p149 = scmp.ne.s32.totalorder %s140, %s141
      %p150 = scmp.eq.s32.totalorder %s25, 0
      %p151 = por %p149, %p150
      %p152 = scmp.ne.s32.totalorder %s140, %s141
      %p153 = scmp.eq.s32.totalorder %s26, 1
      %p154 = por %p152, %p153
      %p156 = scmp.ne.s32.totalorder %s141, %s155
      %p157 = scmp.eq.s32.totalorder %s26, 0
      %p158 = por %p156, %p157
      %s159 = ssub.s32 %s27, %s39
      %s160 = ssub.s32 %s28, %s35
      %s161 = sor.u32 %s159, %s160
      %p162 = scmp.eq.s32.totalorder %s161, 0
      %s164 = sadd.s32 %s163, 1
      %s165 = scalar_select %p162, %s163, %s164
      %p168 = pneg %p162
      %p169 = scmp.eq.s32.totalorder %s20, 1
      %p170 = por %p168, %p169
      %p171 = scmp.ne.s32.totalorder %s163, %s166
      %p172 = scmp.eq.s32.totalorder %s20, 0
      %p173 = por %p171, %p172
      %p174 = scmp.ne.s32.totalorder %s163, %s166
      %p175 = scmp.eq.s32.totalorder %s25, 1
      %p176 = por %p174, %p175
      %p177 = scmp.ne.s32.totalorder %s166, %s167
      %p178 = scmp.eq.s32.totalorder %s25, 0
      %p179 = por %p177, %p178
      %p180 = scmp.ne.s32.totalorder %s166, %s167
      %p181 = scmp.eq.s32.totalorder %s26, 1
      %p182 = por %p180, %p181
      %p184 = scmp.ne.s32.totalorder %s167, %s183
      %p185 = scmp.eq.s32.totalorder %s26, 0
      %p186 = por %p184, %p185
      %p187 = scmp.le.s32.totalorder 1, %s20
      %p188 = scmp.lt.s32.totalorder %s20, 3
      %p189 = pnand %p187, %p188
      %p190 = pneg %p189
      // Predicated region
      $region9: #{tpu_custom_call.1} parent=5 // pred_check
        _
      $region10: #{tpu_custom_call.1} parent=5 // pred_check_branch
        %192 = sbr.rel (%p189) target = $region12
      $region11: #{tpu_custom_call.1} parent=5 // pred_region
        %s193 = ssub.s32 %s20, 1
        // Predicated region
        $region13: #{tpu_custom_call.1} parent=11 // pred_check
          %p194 = pneg %p109
        $region14: #{tpu_custom_call.1} parent=11 // pred_check_branch
          %196 = sbr.rel (%p194) target = $region16
        $region15: #{tpu_custom_call.1} parent=11 // pred_region
          _
        $region16: #{tpu_custom_call.1} parent=11 // pred_fallthru
          _
        // Predicated region
        $region17: #{tpu_custom_call.1} parent=11 // pred_check
          %p197 = pneg %p130
        $region18: #{tpu_custom_call.1} parent=11 // pred_check_branch
          %199 = sbr.rel (%p197) target = $region20
        $region19: #{tpu_custom_call.1} parent=11 // pred_region
          %s201 = ssub.s32 1024, 1024
          %202 = vsyncadd [#allocation6], %s201
          %s203 = sshll.u32 [#allocation7], 4
          %s204 = int_to_ptr.vmem [resolvable:$true] %s203
          %209 = dma.hbm_to_vmem [thread:$0]  %s3, 1024, %s204, [#allocation6], 128, 128, 8
        $region20: #{tpu_custom_call.1} parent=11 // pred_fallthru
          _
        // Predicated region
        $region21: #{tpu_custom_call.1} parent=11 // pred_check
          %p210 = pneg %p151
        $region22: #{tpu_custom_call.1} parent=11 // pred_check_branch
          %212 = sbr.rel (%p210) target = $region24
        $region23: #{tpu_custom_call.1} parent=11 // pred_region
          _
        $region24: #{tpu_custom_call.1} parent=11 // pred_fallthru
          _
      $region12: #{tpu_custom_call.1} parent=5 // pred_fallthru
        _
      %p213 = scmp.lt.s32.totalorder %s20, 2
      // Predicated region
      $region25: #{tpu_custom_call.1} parent=5 // pred_check
        %p214 = pneg %p213
      $region26: #{tpu_custom_call.1} parent=5 // pred_check_branch
        %216 = sbr.rel (%p214) target = $region28
      $region27: #{tpu_custom_call.1} parent=5 // pred_region
        // Predicated region
        $region29: #{tpu_custom_call.1} parent=27 // pred_check
          %p217 = pneg %p54
        $region30: #{tpu_custom_call.1} parent=27 // pred_check_branch
          %219 = sbr.rel (%p217) target = $region32
        $region31: #{tpu_custom_call.1} parent=27 // pred_region
          %s220 = sand.u32 %s44, 1
          %s221 = scalar_lea.sflag [#allocation3], %s220
          %s222 = sand.u32 %s44, 1
          %s223 = smul.addr %s222, 128
          %s224 = scalar_lea.vmem [#allocation2], %s223
          %s225 = smul.u32 2, %s28
          %s227 = ssub.s32 2048, 2048
          %228 = vsyncadd %s221, %s227
          %s229 = smul.addr %s27, 16
          %s230 = sadd.s32 %s225, %s229
          %s231 = smul.addr %s230, 128
          %s232 = scalar_lea.hbm %s0, %s231
          %s233 = sshll.u32 %s224, 4
          %s234 = int_to_ptr.vmem [resolvable:$true] %s233
          %239 = dma.hbm_to_vmem [thread:$0]  %s232, 2048, %s234, %s221, 256, 256, 16
        $region32: #{tpu_custom_call.1} parent=27 // pred_fallthru
          _
        // Predicated region
        $region33: #{tpu_custom_call.1} parent=27 // pred_check
          %p240 = pneg %p82
        $region34: #{tpu_custom_call.1} parent=27 // pred_check_branch
          %242 = sbr.rel (%p240) target = $region36
        $region35: #{tpu_custom_call.1} parent=27 // pred_region
          %s243 = sand.u32 %s20, 1
          %s244 = scalar_lea.sflag [#allocation6], %s243
          %s245 = sand.u32 %s72, 1
          %s246 = smul.addr %s245, 128
          %s247 = scalar_lea.vmem [#allocation5], %s246
          %s248 = smul.u32 2, %s28
          %s250 = ssub.s32 2048, 2048
          %251 = vsyncadd %s244, %s250
          %s252 = smul.addr %s27, 16
          %s253 = sadd.s32 %s248, %s252
          %s254 = smul.addr %s253, 128
          %s255 = scalar_lea.hbm %s1, %s254
          %s256 = sshll.u32 %s247, 4
          %s257 = int_to_ptr.vmem [resolvable:$true] %s256
          %262 = dma.hbm_to_vmem [thread:$0]  %s255, 2048, %s257, %s244, 256, 256, 16
        $region36: #{tpu_custom_call.1} parent=27 // pred_fallthru
          _
      $region28: #{tpu_custom_call.1} parent=5 // pred_fallthru
        _
      %p263 = scmp.le.s32.totalorder 1, %s20
      %p264 = scmp.lt.s32.totalorder %s20, 3
      %p265 = pnand %p263, %p264
      %p266 = pneg %p265
      // Predicated region
      $region37: #{tpu_custom_call.1} parent=5 // pred_check
        _
      $region38: #{tpu_custom_call.1} parent=5 // pred_check_branch
        %268 = sbr.rel (%p265) target = $region40
      $region39: #{tpu_custom_call.1} parent=5 // pred_region
        %s269 = ssub.s32 %s20, 1
        %s270 = sand.u32 %s47, 1
        %s271 = scalar_lea.sflag [#allocation3], %s270
        %s272 = sand.u32 %s47, 1
        %s273 = smul.addr %s272, 128
        %s274 = scalar_lea.vmem [#allocation2], %s273
        // Predicated region
        $region41: #{tpu_custom_call.1} parent=39 // pred_check
          %p275 = pneg %p60
        $region42: #{tpu_custom_call.1} parent=39 // pred_check_branch
          %277 = sbr.rel (%p275) target = $region44
        $region43: #{tpu_custom_call.1} parent=39 // pred_region
          %278 = dma.done %s271, 2048
        $region44: #{tpu_custom_call.1} parent=39 // pred_fallthru
          _
        %s279 = sand.u32 %s25, 1
        %s280 = scalar_lea.sflag [#allocation6], %s279
        %s281 = sand.u32 %s75, 1
        %s282 = smul.addr %s281, 128
        %s283 = scalar_lea.vmem [#allocation5], %s282
        // Predicated region
        $region45: #{tpu_custom_call.1} parent=39 // pred_check
          %p284 = pneg %p88
        $region46: #{tpu_custom_call.1} parent=39 // pred_check_branch
          %286 = sbr.rel (%p284) target = $region48
        $region47: #{tpu_custom_call.1} parent=39 // pred_region
          %287 = dma.done %s280, 2048
        $region48: #{tpu_custom_call.1} parent=39 // pred_fallthru
          _
        // Predicated region
        $region49: #{tpu_custom_call.1} parent=39 // pred_check
          %p288 = pneg %p130
        $region50: #{tpu_custom_call.1} parent=39 // pred_check_branch
          %290 = sbr.rel (%p288) target = $region52
        $region51: #{tpu_custom_call.1} parent=39 // pred_region
          %291 = dma.done [#allocation6], 1024
        $region52: #{tpu_custom_call.1} parent=39 // pred_fallthru
          _
        %s292 = sand.u32 %s47, 1
        %s293 = scalar_lea.sflag [#allocation3], %s292
        %s294 = sand.u32 %s47, 1
        %s295 = smul.addr %s294, 128
        %s296 = scalar_lea.vmem [#allocation2], %s295
        %p297 = pneg %p60
        %p298 = pneg %p57
        %s299 = sand.u32 %s25, 1
        %s300 = scalar_lea.sflag [#allocation6], %s299
        %s301 = sand.u32 %s75, 1
        %s302 = smul.addr %s301, 128
        %s303 = scalar_lea.vmem [#allocation5], %s302
        %p304 = pneg %p88
        %p305 = pneg %p85
        %p306 = pneg %p109
        %p307 = pneg %p106
        %p308 = pneg %p130
        %p309 = pneg %p127
        %p310 = pneg %p151
        %p311 = pneg %p148
        %p312 = pneg %p179
        %p313 = pneg %p176
        %s314 = sand.u32 %s166, 1
        %s315 = scalar_lea.sflag [#allocation4], %s314
        %s316 = sand.u32 %s166, 1
        %s317 = smul.addr %s316, 128
        %s318 = scalar_lea.vmem [#allocation8], %s317
        %s319 = smul.u32 2, %s30
        %s320 = smul.u32 2, %s30
        %s321 = smul.u32 2, %s30
        %v322 = vld [vmem:[%s2] sm:$0xff]
        %v323 = vld [vmem:[%s2 + $0x8] sm:$0xff]
        %v324 = vld [vmem:[%s2 + $0x10] sm:$0xff]
        %v325 = vld [vmem:[%s2 + $0x18] sm:$0xff]
        %v326 = vld [vmem:[%s2 + $0x20] sm:$0xff]
        %v327 = vld [vmem:[%s2 + $0x28] sm:$0xff]
        %v328 = vld [vmem:[%s2 + $0x30] sm:$0xff]
        %v329 = vld [vmem:[%s2 + $0x38] sm:$0xff]
        %v330 = vld [vmem:[%s274] sm:$0xff]
        %v331 = vld [vmem:[%s274 + $0x8] sm:$0xff]
        %v332 = vld [vmem:[%s274 + $0x10] sm:$0xff]
        %v333 = vld [vmem:[%s274 + $0x18] sm:$0xff]
        %v334 = vld [vmem:[%s274 + $0x20] sm:$0xff]
        %v335 = vld [vmem:[%s274 + $0x28] sm:$0xff]
        %v336 = vld [vmem:[%s274 + $0x30] sm:$0xff]
        %v337 = vld [vmem:[%s274 + $0x38] sm:$0xff]
        %v338 = vld [vmem:[%s274 + $0x40] sm:$0xff]
        %v339 = vld [vmem:[%s274 + $0x48] sm:$0xff]
        %v340 = vld [vmem:[%s274 + $0x50] sm:$0xff]
        %v341 = vld [vmem:[%s274 + $0x58] sm:$0xff]
        %v342 = vld [vmem:[%s274 + $0x60] sm:$0xff]
        %v343 = vld [vmem:[%s274 + $0x68] sm:$0xff]
        %v344 = vld [vmem:[%s274 + $0x70] sm:$0xff]
        %v345 = vld [vmem:[%s274 + $0x78] sm:$0xff]
        %v346 = vld [vmem:[#allocation7] sm:$0xff]
        %v347 = vld [vmem:[#allocation7 + $0x8] sm:$0xff]
        %v348 = vld [vmem:[#allocation7 + $0x10] sm:$0xff]
        %v349 = vld [vmem:[#allocation7 + $0x18] sm:$0xff]
        %v350 = vld [vmem:[#allocation7 + $0x20] sm:$0xff]
        %v351 = vld [vmem:[#allocation7 + $0x28] sm:$0xff]
        %v352 = vld [vmem:[#allocation7 + $0x30] sm:$0xff]
        %v353 = vld [vmem:[#allocation7 + $0x38] sm:$0xff]
        %v354 = vld [vmem:[%s283] sm:$0xff]
        %v355 = vld [vmem:[%s283 + $0x8] sm:$0xff]
        %v356 = vld [vmem:[%s283 + $0x10] sm:$0xff]
        %v357 = vld [vmem:[%s283 + $0x18] sm:$0xff]
        %v358 = vld [vmem:[%s283 + $0x20] sm:$0xff]
        %v359 = vld [vmem:[%s283 + $0x28] sm:$0xff]
        %v360 = vld [vmem:[%s283 + $0x30] sm:$0xff]
        %v361 = vld [vmem:[%s283 + $0x38] sm:$0xff]
        %v362 = vld [vmem:[%s283 + $0x40] sm:$0xff]
        %v363 = vld [vmem:[%s283 + $0x48] sm:$0xff]
        %v364 = vld [vmem:[%s283 + $0x50] sm:$0xff]
        %v365 = vld [vmem:[%s283 + $0x58] sm:$0xff]
        %v366 = vld [vmem:[%s283 + $0x60] sm:$0xff]
        %v367 = vld [vmem:[%s283 + $0x68] sm:$0xff]
        %v368 = vld [vmem:[%s283 + $0x70] sm:$0xff]
        %v369 = vld [vmem:[%s283 + $0x78] sm:$0xff]
        %vm370 = vcmask 523264
        %v372 = vsel %vm370, %v346, 0
        %v375 = vsel %vm370, %v347, 0
        %v378 = vsel %vm370, %v348, 0
        %v381 = vsel %vm370, %v349, 0
        %v384 = vsel %vm370, %v350, 0
        %v387 = vsel %vm370, %v351, 0
        %v390 = vsel %vm370, %v352, 0
        %v393 = vsel %vm370, %v353, 0
        %395 = vmatprep.subr.mxu0 %v355
        %396 = vmatpush1.msra.mxu0 %v354
        %397 = vmatprep.subr.mxu0 %v357
        %398 = vmatpush1.msra.mxu0 %v356
        %399 = vmatprep.subr.mxu0 %v359
        %400 = vmatpush1.msra.mxu0 %v358
        %401 = vmatprep.subr.mxu0 %v361
        %402 = vmatpush1.msra.mxu0 %v360
        %403 = vmatprep.subr.mxu0 %v363
        %404 = vmatpush1.msra.mxu0 %v362
        %405 = vmatprep.subr.mxu0 %v365
        %406 = vmatpush1.msra.mxu0 %v364
        %407 = vmatprep.subr.mxu0 %v367
        %408 = vmatpush1.msra.mxu0 %v366
        %409 = vmatprep.subr.mxu0 %v369
        %410 = vmatpush1.msra.mxu0 %v368
        %411 = vmatprep.subr.mxu0 0.0
        %412 = vmatpush1.msra.mxu0 0.0
        %413 = vmatprep.subr.mxu0 0.0
        %414 = vmatpush1.msra.mxu0 0.0
        %415 = vmatprep.subr.mxu0 0.0
        %416 = vmatpush1.msra.mxu0 0.0
        %417 = vmatprep.subr.mxu0 0.0
        %418 = vmatpush1.msra.mxu0 0.0
        %419 = vmatprep.subr.mxu0 0.0
        %420 = vmatpush1.msra.mxu0 0.0
        %421 = vmatprep.subr.mxu0 0.0
        %422 = vmatpush1.msra.mxu0 0.0
        %423 = vmatprep.subr.mxu0 0.0
        %424 = vmatpush1.msra.mxu0 0.0
        %425 = vmatprep.subr.mxu0 0.0
        %426 = vmatpush1.msra.mxu0 0.0
        %427 = vmatprep.subr.mxu0 0.0
        %428 = vmatpush1.msra.mxu0 0.0
        %429 = vmatprep.subr.mxu0 0.0
        %430 = vmatpush1.msra.mxu0 0.0
        %431 = vmatprep.subr.mxu0 0.0
        %432 = vmatpush1.msra.mxu0 0.0
        %433 = vmatprep.subr.mxu0 0.0
        %434 = vmatpush1.msra.mxu0 0.0
        %435 = vmatprep.subr.mxu0 0.0
        %436 = vmatpush1.msra.mxu0 0.0
        %437 = vmatprep.subr.mxu0 0.0
        %438 = vmatpush1.msra.mxu0 0.0
        %439 = vmatprep.subr.mxu0 0.0
        %440 = vmatpush1.msra.mxu0 0.0
        %441 = vmatprep.subr.mxu0 0.0
        %442 = vmatpush1.msra.mxu0 0.0
        %443 = vmatprep.subr.mxu0 0.0
        %444 = vmatpush1.msra.mxu0 0.0
        %445 = vmatprep.subr.mxu0 0.0
        %446 = vmatpush1.msra.mxu0 0.0
        %447 = vmatprep.subr.mxu0 0.0
        %448 = vmatpush1.msra.mxu0 0.0
        %449 = vmatprep.subr.mxu0 0.0
        %450 = vmatpush1.msra.mxu0 0.0
        %451 = vmatprep.subr.mxu0 0.0
        %452 = vmatpush1.msra.mxu0 0.0
        %453 = vmatprep.subr.mxu0 0.0
        %454 = vmatpush1.msra.mxu0 0.0
        %455 = vmatprep.subr.mxu0 0.0
        %456 = vmatpush1.msra.mxu0 0.0
        %457 = vmatprep.subr.mxu0 0.0
        %458 = vmatpush1.msra.mxu0 0.0
        %459 = vmatprep.mubr.f32.mxu0 0.0
        %460 = vmatmul.mubr.f32.gmra.mrb[0].mxu0 %v372
        %v461 = vpop.f32.mrb[0].mxu0
        %v462 = vadd.f32 0.0, %v461
        %v463 = vpop.f32.mrb[0].mxu0
        %v464 = vadd.f32 0.0, %v463
        %465 = vmatprep.mubr.f32.mxu0 0.0
        %466 = vmatmul.mubr.f32.gmra.mrb[0].mxu0 %v375
        %v467 = vpop.f32.mrb[0].mxu0
        %v468 = vadd.f32 0.0, %v467
        %v469 = vpop.f32.mrb[0].mxu0
        %v470 = vadd.f32 0.0, %v469
        %471 = vmatprep.mubr.f32.mxu0 0.0
        %472 = vmatmul.mubr.f32.gmra.mrb[0].mxu0 %v378
        %v473 = vpop.f32.mrb[0].mxu0
        %v474 = vadd.f32 0.0, %v473
        %v475 = vpop.f32.mrb[0].mxu0
        %v476 = vadd.f32 0.0, %v475
        %477 = vmatprep.mubr.f32.mxu0 0.0
        %478 = vmatmul.mubr.f32.gmra.mrb[0].mxu0 %v381
        %v479 = vpop.f32.mrb[0].mxu0
        %v480 = vadd.f32 0.0, %v479
        %v481 = vpop.f32.mrb[0].mxu0
        %v482 = vadd.f32 0.0, %v481
        %483 = vmatprep.mubr.f32.mxu0 0.0
        %484 = vmatmul.mubr.f32.gmra.mrb[0].mxu0 %v384
        %v485 = vpop.f32.mrb[0].mxu0
        %v486 = vadd.f32 0.0, %v485
        %v487 = vpop.f32.mrb[0].mxu0
        %v488 = vadd.f32 0.0, %v487
        %489 = vmatprep.mubr.f32.mxu0 0.0
        %490 = vmatmul.mubr.f32.gmra.mrb[0].mxu0 %v387
        %v491 = vpop.f32.mrb[0].mxu0
        %v492 = vadd.f32 0.0, %v491
        %v493 = vpop.f32.mrb[0].mxu0
        %v494 = vadd.f32 0.0, %v493
        %495 = vmatprep.mubr.f32.mxu0 0.0
        %496 = vmatmul.mubr.f32.gmra.mrb[0].mxu0 %v390
        %v497 = vpop.f32.mrb[0].mxu0
        %v498 = vadd.f32 0.0, %v497
        %v499 = vpop.f32.mrb[0].mxu0
        %v500 = vadd.f32 0.0, %v499
        %501 = vmatprep.mubr.f32.mxu0 0.0
        %502 = vmatmul.mubr.f32.gmra.mrb[0].mxu0 %v393
        %v503 = vpop.f32.mrb[0].mxu0
        %v504 = vadd.f32 0.0, %v503
        %v505 = vpop.f32.mrb[0].mxu0
        %v506 = vadd.f32 0.0, %v505
        %507 = vdwg.mxu0
        %v509 = vsel %vm370, %v322, 0
        %v512 = vsel %vm370, %v323, 0
        %v515 = vsel %vm370, %v324, 0
        %v518 = vsel %vm370, %v325, 0
        %v521 = vsel %vm370, %v326, 0
        %v524 = vsel %vm370, %v327, 0
        %v527 = vsel %vm370, %v328, 0
        %v530 = vsel %vm370, %v329, 0
        %532 = vmatprep.subr.mxu0 %v331
        %533 = vmatpush1.msra.mxu0 %v330
        %534 = vmatprep.subr.mxu0 %v333
        %535 = vmatpush1.msra.mxu0 %v332
        %536 = vmatprep.subr.mxu0 %v335
        %537 = vmatpush1.msra.mxu0 %v334
        %538 = vmatprep.subr.mxu0 %v337
        %539 = vmatpush1.msra.mxu0 %v336
        %540 = vmatprep.subr.mxu0 %v339
        %541 = vmatpush1.msra.mxu0 %v338
        %542 = vmatprep.subr.mxu0 %v341
        %543 = vmatpush1.msra.mxu0 %v340
        %544 = vmatprep.subr.mxu0 %v343
        %545 = vmatpush1.msra.mxu0 %v342
        %546 = vmatprep.subr.mxu0 %v345
        %547 = vmatpush1.msra.mxu0 %v344
        %548 = vmatprep.subr.mxu0 0.0
        %549 = vmatpush1.msra.mxu0 0.0
        %550 = vmatprep.subr.mxu0 0.0
        %551 = vmatpush1.msra.mxu0 0.0
        %552 = vmatprep.subr.mxu0 0.0
        %553 = vmatpush1.msra.mxu0 0.0
        %554 = vmatprep.subr.mxu0 0.0
        %555 = vmatpush1.msra.mxu0 0.0
        %556 = vmatprep.subr.mxu0 0.0
        %557 = vmatpush1.msra.mxu0 0.0
        %558 = vmatprep.subr.mxu0 0.0
        %559 = vmatpush1.msra.mxu0 0.0
        %560 = vmatprep.subr.mxu0 0.0
        %561 = vmatpush1.msra.mxu0 0.0
        %562 = vmatprep.subr.mxu0 0.0
        %563 = vmatpush1.msra.mxu0 0.0
        %564 = vmatprep.subr.mxu0 0.0
        %565 = vmatpush1.msra.mxu0 0.0
        %566 = vmatprep.subr.mxu0 0.0
        %567 = vmatpush1.msra.mxu0 0.0
        %568 = vmatprep.subr.mxu0 0.0
        %569 = vmatpush1.msra.mxu0 0.0
        %570 = vmatprep.subr.mxu0 0.0
        %571 = vmatpush1.msra.mxu0 0.0
        %572 = vmatprep.subr.mxu0 0.0
        %573 = vmatpush1.msra.mxu0 0.0
        %574 = vmatprep.subr.mxu0 0.0
        %575 = vmatpush1.msra.mxu0 0.0
        %576 = vmatprep.subr.mxu0 0.0
        %577 = vmatpush1.msra.mxu0 0.0
        %578 = vmatprep.subr.mxu0 0.0
        %579 = vmatpush1.msra.mxu0 0.0
        %580 = vmatprep.subr.mxu0 0.0
        %581 = vmatpush1.msra.mxu0 0.0
        %582 = vmatprep.subr.mxu0 0.0
        %583 = vmatpush1.msra.mxu0 0.0
        %584 = vmatprep.subr.mxu0 0.0
        %585 = vmatpush1.msra.mxu0 0.0
        %586 = vmatprep.subr.mxu0 0.0
        %587 = vmatpush1.msra.mxu0 0.0
        %588 = vmatprep.subr.mxu0 0.0
        %589 = vmatpush1.msra.mxu0 0.0
        %590 = vmatprep.subr.mxu0 0.0
        %591 = vmatpush1.msra.mxu0 0.0
        %592 = vmatprep.subr.mxu0 0.0
        %593 = vmatpush1.msra.mxu0 0.0
        %594 = vmatprep.subr.mxu0 0.0
        %595 = vmatpush1.msra.mxu0 0.0
        %596 = vmatprep.mubr.f32.mxu0 0.0
        %597 = vmatmul.mubr.f32.gmra.mrb[0].mxu0 %v509
        %v598 = vpop.f32.mrb[0].mxu0
        %v599 = vadd.f32 %v462, %v598
        %v600 = vpop.f32.mrb[0].mxu0
        %v601 = vadd.f32 %v464, %v600
        %602 = vmatprep.mubr.f32.mxu0 0.0
        %603 = vmatmul.mubr.f32.gmra.mrb[0].mxu0 %v512
        %v604 = vpop.f32.mrb[0].mxu0
        %v605 = vadd.f32 %v468, %v604
        %v606 = vpop.f32.mrb[0].mxu0
        %v607 = vadd.f32 %v470, %v606
        %608 = vmatprep.mubr.f32.mxu0 0.0
        %609 = vmatmul.mubr.f32.gmra.mrb[0].mxu0 %v515
        %v610 = vpop.f32.mrb[0].mxu0
        %v611 = vadd.f32 %v474, %v610
        %v612 = vpop.f32.mrb[0].mxu0
        %v613 = vadd.f32 %v476, %v612
        %614 = vmatprep.mubr.f32.mxu0 0.0
        %615 = vmatmul.mubr.f32.gmra.mrb[0].mxu0 %v518
        %v616 = vpop.f32.mrb[0].mxu0
        %v617 = vadd.f32 %v480, %v616
        %v618 = vpop.f32.mrb[0].mxu0
        %v619 = vadd.f32 %v482, %v618
        %620 = vmatprep.mubr.f32.mxu0 0.0
        %621 = vmatmul.mubr.f32.gmra.mrb[0].mxu0 %v521
        %v622 = vpop.f32.mrb[0].mxu0
        %v623 = vadd.f32 %v486, %v622
        %v624 = vpop.f32.mrb[0].mxu0
        %v625 = vadd.f32 %v488, %v624
        %626 = vmatprep.mubr.f32.mxu0 0.0
        %627 = vmatmul.mubr.f32.gmra.mrb[0].mxu0 %v524
        %v628 = vpop.f32.mrb[0].mxu0
        %v629 = vadd.f32 %v492, %v628
        %v630 = vpop.f32.mrb[0].mxu0
        %v631 = vadd.f32 %v494, %v630
        %632 = vmatprep.mubr.f32.mxu0 0.0
        %633 = vmatmul.mubr.f32.gmra.mrb[0].mxu0 %v527
        %v634 = vpop.f32.mrb[0].mxu0
        %v635 = vadd.f32 %v498, %v634
        %v636 = vpop.f32.mrb[0].mxu0
        %v637 = vadd.f32 %v500, %v636
        %638 = vmatprep.mubr.f32.mxu0 0.0
        %639 = vmatmul.mubr.f32.gmra.mrb[0].mxu0 %v530
        %v640 = vpop.f32.mrb[0].mxu0
        %v641 = vadd.f32 %v504, %v640
        %v642 = vpop.f32.mrb[0].mxu0
        %v643 = vadd.f32 %v506, %v642
        %644 = vdwg.mxu0
        %v645 = vld [vmem:[%s4] sm:$0xff]
        %v646 = vld [vmem:[%s4 + $0x8] sm:$0xff]
        %v647 = vld [vmem:[%s4 + $0x10] sm:$0xff]
        %v648 = vld [vmem:[%s4 + $0x18] sm:$0xff]
        %v649 = vld [vmem:[%s4 + $0x20] sm:$0xff]
        %v650 = vld [vmem:[%s4 + $0x28] sm:$0xff]
        %v651 = vld [vmem:[%s4 + $0x30] sm:$0xff]
        %v652 = vld [vmem:[%s4 + $0x38] sm:$0xff]
        %654 = vset.pattern.permute.xlu0 0
        %655 = vperm.xlu0 %654, %v645
        %v656 = vpop.permute.xlu0 %655
        %659 = vset.pattern.permute.xlu0 0
        %660 = vperm.xlu0 %659, %v646
        %v661 = vpop.permute.xlu0 %660
        %664 = vset.pattern.permute.xlu0 0
        %665 = vperm.xlu0 %664, %v647
        %v666 = vpop.permute.xlu0 %665
        %669 = vset.pattern.permute.xlu0 0
        %670 = vperm.xlu0 %669, %v648
        %v671 = vpop.permute.xlu0 %670
        %674 = vset.pattern.permute.xlu0 0
        %675 = vperm.xlu0 %674, %v649
        %v676 = vpop.permute.xlu0 %675
        %679 = vset.pattern.permute.xlu0 0
        %680 = vperm.xlu0 %679, %v650
        %v681 = vpop.permute.xlu0 %680
        %684 = vset.pattern.permute.xlu0 0
        %685 = vperm.xlu0 %684, %v651
        %v686 = vpop.permute.xlu0 %685
        %689 = vset.pattern.permute.xlu0 0
        %690 = vperm.xlu0 %689, %v652
        %v691 = vpop.permute.xlu0 %690
        %v693 = vadd.f32 %v599, %v656
        %v694 = vadd.f32 %v601, %v656
        %v695 = vadd.f32 %v605, %v661
        %v696 = vadd.f32 %v607, %v661
        %v697 = vadd.f32 %v611, %v666
        %v698 = vadd.f32 %v613, %v666
        %v699 = vadd.f32 %v617, %v671
        %v700 = vadd.f32 %v619, %v671
        %v701 = vadd.f32 %v623, %v676
        %v702 = vadd.f32 %v625, %v676
        %v703 = vadd.f32 %v629, %v681
        %v704 = vadd.f32 %v631, %v681
        %v705 = vadd.f32 %v635, %v686
        %v706 = vadd.f32 %v637, %v686
        %v707 = vadd.f32 %v641, %v691
        %v708 = vadd.f32 %v643, %v691
        %709 = vst [vmem:[%s318] sm:$0xff] %v693
        %710 = vst [vmem:[%s318 + $0x8] sm:$0xff] %v694
        %711 = vst [vmem:[%s318 + $0x10] sm:$0xff] %v695
        %712 = vst [vmem:[%s318 + $0x18] sm:$0xff] %v696
        %713 = vst [vmem:[%s318 + $0x20] sm:$0xff] %v697
        %714 = vst [vmem:[%s318 + $0x28] sm:$0xff] %v698
        %715 = vst [vmem:[%s318 + $0x30] sm:$0xff] %v699
        %716 = vst [vmem:[%s318 + $0x38] sm:$0xff] %v700
        %717 = vst [vmem:[%s318 + $0x40] sm:$0xff] %v701
        %718 = vst [vmem:[%s318 + $0x48] sm:$0xff] %v702
        %719 = vst [vmem:[%s318 + $0x50] sm:$0xff] %v703
        %720 = vst [vmem:[%s318 + $0x58] sm:$0xff] %v704
        %721 = vst [vmem:[%s318 + $0x60] sm:$0xff] %v705
        %722 = vst [vmem:[%s318 + $0x68] sm:$0xff] %v706
        %723 = vst [vmem:[%s318 + $0x70] sm:$0xff] %v707
        %724 = vst [vmem:[%s318 + $0x78] sm:$0xff] %v708
        %s725 = sand.u32 %s166, 1
        %s726 = scalar_lea.sflag [#allocation4], %s725
        %s727 = sand.u32 %s166, 1
        %s728 = smul.addr %s727, 128
        %s729 = scalar_lea.vmem [#allocation8], %s728
        // Predicated region
        $region53: #{tpu_custom_call.1} parent=39 // pred_check
          %p730 = pneg %p176
        $region54: #{tpu_custom_call.1} parent=39 // pred_check_branch
          %732 = sbr.rel (%p730) target = $region56
        $region55: #{tpu_custom_call.1} parent=39 // pred_region
          %s733 = smul.u32 2, %s30
          %s735 = ssub.s32 2048, 2048
          %736 = vsyncadd %s726, %s735
          %s737 = smul.addr %s29, 16
          %s738 = sadd.s32 %s733, %s737
          %s739 = smul.addr %s738, 128
          %s740 = scalar_lea.hbm %s5, %s739
          %s741 = sshll.u32 %s729, 4
          %s742 = int_to_ptr.vmem [resolvable:$true] %s741
          %747 = dma.vmem_to_hbm [thread:$0]  %s742, 2048, %s740, %s726, 256, 256, 16
        $region56: #{tpu_custom_call.1} parent=39 // pred_fallthru
          _
      $region40: #{tpu_custom_call.1} parent=5 // pred_fallthru
        _
      %p748 = scmp.le.s32.totalorder 2, %s20
      // Predicated region
      $region57: #{tpu_custom_call.1} parent=5 // pred_check
        %p749 = pneg %p748
      $region58: #{tpu_custom_call.1} parent=5 // pred_check_branch
        %751 = sbr.rel (%p749) target = $region60
      $region59: #{tpu_custom_call.1} parent=5 // pred_region
        %s752 = ssub.s32 %s20, 2
        // Predicated region
        $region61: #{tpu_custom_call.1} parent=59 // pred_check
          %p753 = pneg %p182
        $region62: #{tpu_custom_call.1} parent=59 // pred_check_branch
          %755 = sbr.rel (%p753) target = $region64
        $region63: #{tpu_custom_call.1} parent=59 // pred_region
          %s756 = sand.u32 %s167, 1
          %s757 = scalar_lea.sflag [#allocation4], %s756
          %s758 = sand.u32 %s167, 1
          %s759 = smul.addr %s758, 128
          %s760 = scalar_lea.vmem [#allocation8], %s759
          %761 = dma.done %s757, 2048
        $region64: #{tpu_custom_call.1} parent=59 // pred_fallthru
          _
      $region60: #{tpu_custom_call.1} parent=5 // pred_fallthru
        _
    $region6: #{tpu_custom_call.1} parent=1 // loop_footer
      %s24 = sadd.s32 1, %s20
    $region7: #{tpu_custom_call.1} parent=1 // loop_footer_branch
      %19 = sbr.rel target = $region3
    $region8: #{tpu_custom_call.1} parent=1 // loop_exit
      _
    %762 = vsyncpa [#allocation3], 1
    %s763 = scalar_lea.sflag [#allocation3], 1
    %764 = vsyncpa %s763, 1
    %765 = vsyncpa [#allocation6], 1
    %s766 = scalar_lea.sflag [#allocation6], 1
    %767 = vsyncpa %s766, 1
    %768 = vsyncpa [#allocation4], 1
    %s769 = scalar_lea.sflag [#allocation4], 1
    %770 = vsyncpa %s769, 1

</llo_original>
